<compile_context>
chip_gen: v6e
topology: v6e:2x2x1
jax: 0.10.0
libtpu: 0.0.40
codegen_flags: <defaults>
</compile_context>

<pallas_src>
import functools

import jax
import jax.numpy as jnp
from jax.experimental import pallas as pl
from jax.experimental.pallas import tpu as pltpu

_H = 128          # per-head hidden width (from the module)
_HF = 2 * _H      # fused (actor+critic) hidden width


def _round_up(x, m):
    return (x + m - 1) // m * m


def _cdiv(a, b):
    return (a + b - 1) // b


def _leaky_relu(x, slope=0.01):
    # max(x, slope*x) == LeakyReLU for slope < 1; 2 VALU ops/elem.
    return jnp.maximum(x, slope * x)


def _boom_kernel(s_ref, p_ref,
                 w1s_ref, w1p_ref, b1_ref,
                 w2_ref, b2_ref,
                 w3_ref, b3_ref,
                 out_ref, *, rew, split_l2):
    # ---- Layer 1 --------------------------------------------------------
    # State columns go through the MXU (bf16 in, f32 accumulate).  The K=rew
    # preference columns are ~1.5% of the FLOPs but would cost a whole MXU
    # pass, so they run as `rew` broadcast-FMAs on the VPU instead.
    s = s_ref[...].astype(jnp.bfloat16)          # no-op if producer gives bf16
    h = jnp.dot(s, w1s_ref[...], preferred_element_type=jnp.float32)
    p = p_ref[...].astype(jnp.float32)
    for k in range(rew):                         # static unroll; rew is tiny
        h = h + p[:, k:k + 1] * w1p_ref[k:k + 1, :]
    h = _leaky_relu(h + b1_ref[...])

    hb = h.astype(jnp.bfloat16)
    b2 = b2_ref[...]

    if split_l2:
        # 128x128-MXU chips (v5e etc.): two 128-wide dots skip the zero
        # off-diagonal blocks of the block-diagonal fused weight.
        ha = _leaky_relu(
            jnp.dot(hb[:, :_H], w2_ref[0], preferred_element_type=jnp.float32)
            + b2[:, :_H])
        hc = _leaky_relu(
            jnp.dot(hb[:, _H:], w2_ref[1], preferred_element_type=jnp.float32)
            + b2[:, _H:])
        w3 = w3_ref[...]
        out = (jnp.dot(ha.astype(jnp.bfloat16), w3[:_H, :],
                       preferred_element_type=jnp.float32)
               + jnp.dot(hc.astype(jnp.bfloat16), w3[_H:, :],
                         preferred_element_type=jnp.float32)
               + b3_ref[...])
    else:
        # v6e/v7x: the fused 256-wide block-diagonal dot fills one 256x256
        # MXU pass, so the zero blocks are free.
        h2 = _leaky_relu(
            jnp.dot(hb, w2_ref[...], preferred_element_type=jnp.float32) + b2)
        out = (jnp.dot(h2.astype(jnp.bfloat16), w3_ref[...],
                       preferred_element_type=jnp.float32)
               + b3_ref[...])

    out_ref[...] = out.astype(out_ref.dtype)     # bf16 lane-dense writeback


def _use_split_layer2():
    """True on 128x128-MXU generations (v2-v5); fused form kept on v6e/v7x."""
    try:
        kind = jax.devices()[0].device_kind.lower()
    except Exception:
        return False
    return any(t in kind for t in ("v2", "v3", "v4", "v5"))


@functools.partial(jax.jit, static_argnames=("action_shape", "reward_shape",
                                             "tile_b", "split_l2"))
def boom_actor_critic_forward(state, preference, packed, *,
                              action_shape, reward_shape,
                              tile_b=2048, split_l2=False):
    """Fused BOOMActorCriticNetwork forward via one Pallas kernel."""
    B, obs = state.shape
    rew = preference.shape[1]
    out_pad = packed["w3"].shape[1]              # lane-dense output width

    # Balanced batch tiling: pad each tile only to a multiple of 8 (no more
    # padding B up to a multiple of TB).  For large batches force >=2 grid
    # steps so v7x can shard the "parallel" axis across both TensorCores.
    n_tiles = _cdiv(B, tile_b)
    if B >= 1024 and n_tiles < 2:
        n_tiles = 2
    TB = _round_up(_cdiv(B, n_tiles), 8)
    B_pad = TB * n_tiles
    if B_pad != B:
        state = jnp.pad(state, ((0, B_pad - B), (0, 0)))
        preference = jnp.pad(preference, ((0, B_pad - B), (0, 0)))

    w2 = packed["w2_split"] if split_l2 else packed["w2"]
    w2_spec = (pl.BlockSpec((2, _H, _H), lambda i: (0, 0, 0)) if split_l2
               else pl.BlockSpec((_HF, _HF), lambda i: (0, 0)))

    in_specs = [
        pl.BlockSpec((TB, obs), lambda i: (i, 0)),       # state tile
        pl.BlockSpec((TB, rew), lambda i: (i, 0)),       # preference tile
        pl.BlockSpec((obs, _HF), lambda i: (0, 0)),      # w1 (state rows), resident
        pl.BlockSpec((rew, _HF), lambda i: (0, 0)),      # w1 (pref rows), f32, VPU
        pl.BlockSpec((1, _HF), lambda i: (0, 0)),        # b1
        w2_spec,                                         # w2 (fused or split)
        pl.BlockSpec((1, _HF), lambda i: (0, 0)),        # b2
        pl.BlockSpec((_HF, out_pad), lambda i: (0, 0)),  # w3 combined, lane-padded
        pl.BlockSpec((1, out_pad), lambda i: (0, 0)),    # b3
    ]
    out_specs = pl.BlockSpec((TB, out_pad), lambda i: (i, 0))

    l2_elems = (2 * _H * _H) if split_l2 else (_HF * _HF)
    w_bytes = (packed["w1s"].size * 2 + packed["w1p"].size * 4
               + w2.size * 2 + packed["w3"].size * 2
               + 4 * (packed["b1"].size + packed["b2"].size
                      + packed["b3"].size))
    io_bytes = (B_pad * (obs * state.dtype.itemsize
                         + rew * preference.dtype.itemsize)
                + B_pad * out_pad * 2)                   # bf16 output
    cost = pl.CostEstimate(
        flops=2 * B_pad * (obs * _HF + rew * _HF + l2_elems + _HF * out_pad),
        transcendentals=0,
        bytes_accessed=int(io_bytes + w_bytes),
    )

    out = pl.pallas_call(
        functools.partial(_boom_kernel, rew=rew, split_l2=split_l2),
        out_shape=jax.ShapeDtypeStruct((B_pad, out_pad), jnp.bfloat16),
        grid=(n_tiles,),
        in_specs=in_specs,
        out_specs=out_specs,
        compiler_params=pltpu.CompilerParams(
            dimension_semantics=("parallel",)),
        cost_estimate=cost,
    )(state, preference,
      packed["w1s"], packed["w1p"], packed["b1"],
      w2, packed["b2"],
      packed["w3"], packed["b3"])

    policy = out[:B, :action_shape].astype(jnp.float32)
    value = out[:B, action_shape:action_shape + reward_shape].astype(jnp.float32)
    return policy, value


# --------------------------------------------------------------------------
# Parameter construction / packing
# --------------------------------------------------------------------------

def _kaiming_uniform(key, fan_in, fan_out):
    # torch.nn.init.kaiming_uniform_ defaults (a=0, fan_in, leaky_relu):
    # bound = sqrt(6 / fan_in) on weight of shape (out, in); stored transposed
    # as (in, out) so the kernel computes x @ W + b.  Biases are zeroed, as in
    # BOOMActorCriticNetwork.init_network().
    bound = jnp.sqrt(6.0 / fan_in)
    w = jax.random.uniform(key, (fan_out, fan_in), jnp.float32, -bound, bound)
    return w.T


def init_params(key, obs_shape, action_shape, reward_shape):
    in_dim = obs_shape + reward_shape
    keys = jax.random.split(key, 6)
    return {
        # Actor: in -> 128 -> 128 -> action
        "w1a": _kaiming_uniform(keys[0], in_dim, _H),
        "b1a": jnp.zeros((1, _H), jnp.float32),
        "w2a": _kaiming_uniform(keys[1], _H, _H),
        "b2a": jnp.zeros((1, _H), jnp.float32),
        "w3a": _kaiming_uniform(keys[2], _H, action_shape),
        "b3a": jnp.zeros((1, action_shape), jnp.float32),
        # Critic: in -> 128 -> 128 -> reward
        "w1c": _kaiming_uniform(keys[3], in_dim, _H),
        "b1c": jnp.zeros((1, _H), jnp.float32),
        "w2c": _kaiming_uniform(keys[4], _H, _H),
        "b2c": jnp.zeros((1, _H), jnp.float32),
        "w3c": _kaiming_uniform(keys[5], _H, reward_shape),
        "b3c": jnp.zeros((1, reward_shape), jnp.float32),
    }


def pack_params(params, obs_shape, action_shape, reward_shape):
    """Fuses per-head weights into MXU-friendly operands (done once, offline)."""
    out_pad = max(128, _round_up(action_shape + reward_shape, 128))

    # Layer 1: [w1a | w1c], split into state / preference row blocks.
    w1 = jnp.concatenate([params["w1a"], params["w1c"]], axis=1)   # (in, 256)
    w1s = w1[:obs_shape].astype(jnp.bfloat16)                      # MXU operand
    w1p = w1[obs_shape:]                                           # f32, VPU FMA path
    b1 = jnp.concatenate([params["b1a"], params["b1c"]], axis=1)

    # Layer 2: fused block-diagonal (v6e/v7x) and stacked split form (v5e).
    w2 = jnp.zeros((_HF, _HF), jnp.float32)
    w2 = (w2.at[:_H, :_H].set(params["w2a"])
             .at[_H:, _H:].set(params["w2c"])).astype(jnp.bfloat16)
    w2_split = jnp.stack([params["w2a"].astype(jnp.bfloat16),
                          params["w2c"].astype(jnp.bfloat16)], axis=0)
    b2 = jnp.concatenate([params["b2a"], params["b2c"]], axis=1)

    # Layer 3: combined, zero-padded to a lane-dense 128-wide output slab.
    a, r = action_shape, reward_shape
    w3 = jnp.zeros((_HF, out_pad), jnp.float32)
    w3 = (w3.at[:_H, :a].set(params["w3a"])
             .at[_H:, a:a + r].set(params["w3c"])).astype(jnp.bfloat16)
    b3 = jnp.zeros((1, out_pad), jnp.float32)
    b3 = b3.at[:, :a].set(params["b3a"]).at[:, a:a + r].set(params["b3c"])

    return {"w1s": w1s, "w1p": w1p, "b1": b1,
            "w2": w2, "w2_split": w2_split, "b2": b2,
            "w3": w3, "b3": b3}


# --------------------------------------------------------------------------
# Pure-JAX reference (f32, matching the PyTorch module)
# --------------------------------------------------------------------------

def _reference_forward(state, preference, params):
    x = jnp.concatenate([state, preference], axis=1)

    def head(x, w1, b1, w2, b2, w3, b3):
        h = _leaky_relu(x @ w1 + b1)
        h = _leaky_relu(h @ w2 + b2)
        return h @ w3 + b3

    policy = head(x, params["w1a"], params["b1a"], params["w2a"], params["b2a"],
                  params["w3a"], params["b3a"])
    value = head(x, params["w1c"], params["b1c"], params["w2c"], params["b2c"],
                 params["w3c"], params["b3c"])
    return policy, value


if __name__ == "__main__":
    OBS_SHAPE = 32      # observation_shape
    ACTION_SHAPE = 8    # action_shape
    REWARD_SHAPE = 4    # reward_shape
    BATCH = 8

    key = jax.random.PRNGKey(0)
    k_state, k_pref, k_params = jax.random.split(key, 3)

    state = jax.random.normal(k_state, (BATCH, OBS_SHAPE), jnp.float32)
    preference = jax.random.normal(k_pref, (BATCH, REWARD_SHAPE), jnp.float32)
    params = init_params(k_params, OBS_SHAPE, ACTION_SHAPE, REWARD_SHAPE)
    packed = pack_params(params, OBS_SHAPE, ACTION_SHAPE, REWARD_SHAPE)

    policy, value = boom_actor_critic_forward(
        state, preference, packed,
        action_shape=ACTION_SHAPE, reward_shape=REWARD_SHAPE,
        split_l2=_use_split_layer2(),
    )
    policy = jax.block_until_ready(policy)
    value = jax.block_until_ready(value)

    # Sanity check against pure-f32 reference (kernel dots run in bf16 with
    # f32 accumulation and the output slab is bf16, so tolerance is loosened).
    ref_policy, ref_value = _reference_forward(state, preference, params)
    assert policy.shape == (BATCH, ACTION_SHAPE)
    assert value.shape == (BATCH, REWARD_SHAPE)
    assert jnp.allclose(policy, ref_policy, atol=1.5e-1, rtol=5e-2)
    assert jnp.allclose(value, ref_value, atol=1.5e-1, rtol=5e-2)

    print("KERNEL_OK")
</pallas_src>

<mosaic_0001>
module attributes {stable_mosaic.version = 11 : i64} {
  func.func @_boom_kernel(%arg0: i32, %arg1: memref<8x32xf32, #tpu.memory_space<vmem>>, %arg2: memref<8x4xf32, #tpu.memory_space<vmem>>, %arg3: memref<32x256xbf16, #tpu.memory_space<vmem>>, %arg4: memref<4x256xf32, #tpu.memory_space<vmem>>, %arg5: memref<1x256xf32, #tpu.memory_space<vmem>>, %arg6: memref<256x256xbf16, #tpu.memory_space<vmem>>, %arg7: memref<1x256xf32, #tpu.memory_space<vmem>>, %arg8: memref<256x128xbf16, #tpu.memory_space<vmem>>, %arg9: memref<1x128xf32, #tpu.memory_space<vmem>>, %arg10: memref<8x128xbf16, #tpu.memory_space<vmem>>) attributes {dimension_semantics = [#tpu.dimension_semantics<parallel>], iteration_bounds = array<i64: 1>, scalar_prefetch = 0 : i64, scratch_operands = 0 : i64, tpu.core_type = #tpu.core_type<tc>, window_params = [{transform_indices = @transform_0, window_bounds = array<i64: 8, 32>}, {transform_indices = @transform_1, window_bounds = array<i64: 8, 4>}, {pipeline_mode = #tpu.pipeline_mode<synchronous>, transform_indices = @transform_2, window_bounds = array<i64: 32, 256>}, {pipeline_mode = #tpu.pipeline_mode<synchronous>, transform_indices = @transform_3, window_bounds = array<i64: 4, 256>}, {pipeline_mode = #tpu.pipeline_mode<synchronous>, transform_indices = @transform_4, window_bounds = array<i64: 1, 256>}, {pipeline_mode = #tpu.pipeline_mode<synchronous>, transform_indices = @transform_5, window_bounds = array<i64: 256, 256>}, {pipeline_mode = #tpu.pipeline_mode<synchronous>, transform_indices = @transform_6, window_bounds = array<i64: 1, 256>}, {pipeline_mode = #tpu.pipeline_mode<synchronous>, transform_indices = @transform_7, window_bounds = array<i64: 256, 128>}, {pipeline_mode = #tpu.pipeline_mode<synchronous>, transform_indices = @transform_8, window_bounds = array<i64: 1, 128>}, {transform_indices = @transform_9, window_bounds = array<i64: 8, 128>}]} {
    %c0 = arith.constant 0 : index
    %c0_0 = arith.constant 0 : index
    %0 = vector.load %arg1[%c0, %c0_0] : memref<8x32xf32, #tpu.memory_space<vmem>>, vector<8x32xf32>
    %1 = arith.truncf %0 : vector<8x32xf32> to vector<8x32xbf16>
    %c0_1 = arith.constant 0 : index
    %c0_2 = arith.constant 0 : index
    %2 = vector.load %arg3[%c0_1, %c0_2] : memref<32x256xbf16, #tpu.memory_space<vmem>>, vector<32x256xbf16>
    %cst = arith.constant dense<0.000000e+00> : vector<8x256xf32>
    %3 = tpu.matmul %1, %2, %cst {dimension_numbers = #tpu.dot_dimension_numbers<[1], [0], [0], [1], [0, 0, 1, 1], [], []>} : vector<8x32xbf16>, vector<32x256xbf16>, vector<8x256xf32> -> vector<8x256xf32>
    %c0_3 = arith.constant 0 : index
    %c0_4 = arith.constant 0 : index
    %4 = vector.load %arg2[%c0_3, %c0_4] : memref<8x4xf32, #tpu.memory_space<vmem>>, vector<8x4xf32>
    %5 = vector.extract_strided_slice %4 {offsets = [0, 0], sizes = [8, 1], strides = [1, 1]} : vector<8x4xf32> to vector<8x1xf32>
    %c0_5 = arith.constant 0 : index
    %c0_6 = arith.constant 0 : index
    %6 = vector.load %arg4[%c0_5, %c0_6] : memref<4x256xf32, #tpu.memory_space<vmem>>, vector<1x256xf32>
    %7 = vector.broadcast %5 : vector<8x1xf32> to vector<8x256xf32>
    %8 = vector.broadcast %6 : vector<1x256xf32> to vector<8x256xf32>
    %9 = arith.mulf %7, %8 : vector<8x256xf32>
    %10 = arith.addf %3, %9 : vector<8x256xf32>
    %11 = vector.extract_strided_slice %4 {offsets = [0, 1], sizes = [8, 1], strides = [1, 1]} : vector<8x4xf32> to vector<8x1xf32>
    %c1 = arith.constant 1 : index
    %c0_7 = arith.constant 0 : index
    %12 = vector.load %arg4[%c1, %c0_7] : memref<4x256xf32, #tpu.memory_space<vmem>>, vector<1x256xf32>
    %13 = vector.broadcast %11 : vector<8x1xf32> to vector<8x256xf32>
    %14 = vector.broadcast %12 : vector<1x256xf32> to vector<8x256xf32>
    %15 = arith.mulf %13, %14 : vector<8x256xf32>
    %16 = arith.addf %10, %15 : vector<8x256xf32>
    %17 = vector.extract_strided_slice %4 {offsets = [0, 2], sizes = [8, 1], strides = [1, 1]} : vector<8x4xf32> to vector<8x1xf32>
    %c2 = arith.constant 2 : index
    %c0_8 = arith.constant 0 : index
    %18 = vector.load %arg4[%c2, %c0_8] : memref<4x256xf32, #tpu.memory_space<vmem>>, vector<1x256xf32>
    %19 = vector.broadcast %17 : vector<8x1xf32> to vector<8x256xf32>
    %20 = vector.broadcast %18 : vector<1x256xf32> to vector<8x256xf32>
    %21 = arith.mulf %19, %20 : vector<8x256xf32>
    %22 = arith.addf %16, %21 : vector<8x256xf32>
    %23 = vector.extract_strided_slice %4 {offsets = [0, 3], sizes = [8, 1], strides = [1, 1]} : vector<8x4xf32> to vector<8x1xf32>
    %c3 = arith.constant 3 : index
    %c0_9 = arith.constant 0 : index
    %24 = vector.load %arg4[%c3, %c0_9] : memref<4x256xf32, #tpu.memory_space<vmem>>, vector<1x256xf32>
    %25 = vector.broadcast %23 : vector<8x1xf32> to vector<8x256xf32>
    %26 = vector.broadcast %24 : vector<1x256xf32> to vector<8x256xf32>
    %27 = arith.mulf %25, %26 : vector<8x256xf32>
    %28 = arith.addf %22, %27 : vector<8x256xf32>
    %c0_10 = arith.constant 0 : index
    %c0_11 = arith.constant 0 : index
    %29 = vector.load %arg5[%c0_10, %c0_11] : memref<1x256xf32, #tpu.memory_space<vmem>>, vector<1x256xf32>
    %30 = vector.broadcast %29 : vector<1x256xf32> to vector<8x256xf32>
    %31 = arith.addf %28, %30 : vector<8x256xf32>
    %cst_12 = arith.constant 0.00999999977 : f32
    %32 = vector.broadcast %cst_12 : f32 to vector<8x256xf32>
    %33 = arith.mulf %32, %31 : vector<8x256xf32>
    %34 = arith.maximumf %31, %33 : vector<8x256xf32>
    %35 = arith.truncf %34 : vector<8x256xf32> to vector<8x256xbf16>
    %c0_13 = arith.constant 0 : index
    %c0_14 = arith.constant 0 : index
    %36 = vector.load %arg7[%c0_13, %c0_14] : memref<1x256xf32, #tpu.memory_space<vmem>>, vector<1x256xf32>
    %c0_15 = arith.constant 0 : index
    %c0_16 = arith.constant 0 : index
    %37 = vector.load %arg6[%c0_15, %c0_16] : memref<256x256xbf16, #tpu.memory_space<vmem>>, vector<256x256xbf16>
    %cst_17 = arith.constant dense<0.000000e+00> : vector<8x256xf32>
    %38 = tpu.matmul %35, %37, %cst_17 {dimension_numbers = #tpu.dot_dimension_numbers<[1], [0], [0], [1], [0, 0, 1, 1], [], []>} : vector<8x256xbf16>, vector<256x256xbf16>, vector<8x256xf32> -> vector<8x256xf32>
    %39 = vector.broadcast %36 : vector<1x256xf32> to vector<8x256xf32>
    %40 = arith.addf %38, %39 : vector<8x256xf32>
    %cst_18 = arith.constant 0.00999999977 : f32
    %41 = vector.broadcast %cst_18 : f32 to vector<8x256xf32>
    %42 = arith.mulf %41, %40 : vector<8x256xf32>
    %43 = arith.maximumf %40, %42 : vector<8x256xf32>
    %44 = arith.truncf %43 : vector<8x256xf32> to vector<8x256xbf16>
    %c0_19 = arith.constant 0 : index
    %c0_20 = arith.constant 0 : index
    %45 = vector.load %arg8[%c0_19, %c0_20] : memref<256x128xbf16, #tpu.memory_space<vmem>>, vector<256x128xbf16>
    %cst_21 = arith.constant dense<0.000000e+00> : vector<8x128xf32>
    %46 = tpu.matmul %44, %45, %cst_21 {dimension_numbers = #tpu.dot_dimension_numbers<[1], [0], [0], [1], [0, 0, 1, 1], [], []>} : vector<8x256xbf16>, vector<256x128xbf16>, vector<8x128xf32> -> vector<8x128xf32>
    %c0_22 = arith.constant 0 : index
    %c0_23 = arith.constant 0 : index
    %47 = vector.load %arg9[%c0_22, %c0_23] : memref<1x128xf32, #tpu.memory_space<vmem>>, vector<1x128xf32>
    %48 = vector.broadcast %47 : vector<1x128xf32> to vector<8x128xf32>
    %49 = arith.addf %46, %48 : vector<8x128xf32>
    %50 = arith.truncf %49 : vector<8x128xf32> to vector<8x128xbf16>
    %c0_24 = arith.constant 0 : index
    %c0_25 = arith.constant 0 : index
    %51 = vector.load %arg10[%c0_24, %c0_25] : memref<8x128xbf16, #tpu.memory_space<vmem>>, vector<8x128xbf16>
    tpu.vector_store %arg10[%c0_24, %c0_25], %50 {strides = array<i32>} : memref<8x128xbf16, #tpu.memory_space<vmem>>, vector<8x128xbf16>,
    return
  }
  func.func @transform_0(%arg0: i32) -> (i32, i32) {
    %c0_i32 = arith.constant 0 : i32
    %c0_i32_0 = arith.constant 0 : i32
    return %arg0, %c0_i32 : i32, i32
  }
  func.func @transform_1(%arg0: i32) -> (i32, i32) {
    %c0_i32 = arith.constant 0 : i32
    %c0_i32_0 = arith.constant 0 : i32
    return %arg0, %c0_i32 : i32, i32
  }
  func.func @transform_2(%arg0: i32) -> (i32, i32) {
    %c0_i32 = arith.constant 0 : i32
    %c0_i32_0 = arith.constant 0 : i32
    %c0_i32_1 = arith.constant 0 : i32
    return %c0_i32, %c0_i32_0 : i32, i32
  }
  func.func @transform_3(%arg0: i32) -> (i32, i32) {
    %c0_i32 = arith.constant 0 : i32
    %c0_i32_0 = arith.constant 0 : i32
    %c0_i32_1 = arith.constant 0 : i32
    return %c0_i32, %c0_i32_0 : i32, i32
  }
  func.func @transform_4(%arg0: i32) -> (i32, i32) {
    %c0_i32 = arith.constant 0 : i32
    %c0_i32_0 = arith.constant 0 : i32
    %c0_i32_1 = arith.constant 0 : i32
    return %c0_i32, %c0_i32_0 : i32, i32
  }
  func.func @transform_5(%arg0: i32) -> (i32, i32) {
    %c0_i32 = arith.constant 0 : i32
    %c0_i32_0 = arith.constant 0 : i32
    %c0_i32_1 = arith.constant 0 : i32
    return %c0_i32, %c0_i32_0 : i32, i32
  }
  func.func @transform_6(%arg0: i32) -> (i32, i32) {
    %c0_i32 = arith.constant 0 : i32
    %c0_i32_0 = arith.constant 0 : i32
    %c0_i32_1 = arith.constant 0 : i32
    return %c0_i32, %c0_i32_0 : i32, i32
  }
  func.func @transform_7(%arg0: i32) -> (i32, i32) {
    %c0_i32 = arith.constant 0 : i32
    %c0_i32_0 = arith.constant 0 : i32
    %c0_i32_1 = arith.constant 0 : i32
    return %c0_i32, %c0_i32_0 : i32, i32
  }
  func.func @transform_8(%arg0: i32) -> (i32, i32) {
    %c0_i32 = arith.constant 0 : i32
    %c0_i32_0 = arith.constant 0 : i32
    %c0_i32_1 = arith.constant 0 : i32
    return %c0_i32, %c0_i32_0 : i32, i32
  }
  func.func @transform_9(%arg0: i32) -> (i32, i32) {
    %c0_i32 = arith.constant 0 : i32
    %c0_i32_0 = arith.constant 0 : i32
    return %arg0, %c0_i32 : i32, i32
  }
}

</mosaic_0001>

<llo_original>
// kernel: boom_actor_critic_forward.1
$region0: #{boom_actor_critic_forward.1}
  #allocation0 [shape = 'u32[]', space=smem, size = 0x4, offset = 0x4, fixed_abs, tag = 'smem constant byte address 0x4 - core index']
  #allocation1 [shape = 'u32[144,128]{1,0:T(1,128)}', space=vmem, size = 0x12000, scoped, tag = 'internal scratch']
  %s0 = inlined_call_operand.vmem [shape: f32[8,32], index: 0, kind: input, shape index: {}]
  %s1 = inlined_call_operand.vmem [shape: f32[8,4], index: 1, kind: input, shape index: {}]
  %s2 = inlined_call_operand.hbm [shape: bf16[32,256], index: 2, kind: input, shape index: {}]
  %s3 = inlined_call_operand.vmem [shape: f32[4,256], index: 3, kind: input, shape index: {}]
  %s4 = inlined_call_operand.hbm [shape: f32[1,256], index: 4, kind: input, shape index: {}]
  %s5 = inlined_call_operand.hbm [shape: bf16[256,256], index: 5, kind: input, shape index: {}]
  %s6 = inlined_call_operand.hbm [shape: f32[1,256], index: 6, kind: input, shape index: {}]
  %s7 = inlined_call_operand.hbm [shape: bf16[256,128], index: 7, kind: input, shape index: {}]
  %s8 = inlined_call_operand.vmem [shape: f32[1,128], index: 8, kind: input, shape index: {}]
  %s9 = inlined_call_operand.vmem [shape: bf16[8,128], index: 9, kind: output, shape index: {}]
  %s10 = sld [smem:[#allocation0]]
  $region66: #{boom_actor_critic_forward.1} parent=0
    _
  %s12 = ssub.s32 1, %s10
  %s13 = scalar_select 0, %s12, %s10
  $region1: #{boom_actor_critic_forward.1} parent=0
    #allocation2 [shape = 'u8[16384]{0}', space=vmem, size = 0x4000, scoped, tag = 'input window, operand 2, single buffered']
    #allocation3 [shape = 's32[1]{0}', space=sflag, size = 0x4, scoped, tag = 'scoped memory for boom_actor_critic_forward.1']
    #allocation4 [shape = 'u8[1024]{0}', space=vmem, size = 0x400, scoped, tag = 'input window, operand 4, single buffered']
    #allocation5 [shape = 's32[1]{0}', space=sflag, size = 0x4, scoped, tag = 'scoped memory for boom_actor_critic_forward.1']
    #allocation6 [shape = 'u8[131072]{0}', space=vmem, size = 0x20000, scoped, tag = 'input window, operand 5, single buffered']
    #allocation7 [shape = 'u8[1024]{0}', space=vmem, size = 0x400, scoped, tag = 'input window, operand 6, single buffered']
    #allocation8 [shape = 's32[1]{0}', space=sflag, size = 0x4, scoped, tag = 'scoped memory for boom_actor_critic_forward.1']
    #allocation9 [shape = 'u8[65536]{0}', space=vmem, size = 0x10000, scoped, tag = 'input window, operand 7, single buffered']
    %14 = vsyncpa [#allocation3], 0
    %15 = vsyncpa [#allocation5], 0
    %16 = vsyncpa [#allocation8], 0
    // Predicated region
    $region2: #{boom_actor_critic_forward.1} parent=1 // pred_check
      _
    $region3: #{boom_actor_critic_forward.1} parent=1 // pred_check_branch
      %18 = sbr.rel (0) target = $region5
    $region4: #{boom_actor_critic_forward.1} parent=1 // pred_region
      _
    $region5: #{boom_actor_critic_forward.1} parent=1 // pred_fallthru
      _
    // Predicated region
    $region6: #{boom_actor_critic_forward.1} parent=1 // pred_check
      _
    $region7: #{boom_actor_critic_forward.1} parent=1 // pred_check_branch
      %20 = sbr.rel (0) target = $region9
    $region8: #{boom_actor_critic_forward.1} parent=1 // pred_region
      _
    $region9: #{boom_actor_critic_forward.1} parent=1 // pred_fallthru
      _
    // Predicated region
    $region10: #{boom_actor_critic_forward.1} parent=1 // pred_check
      _
    $region11: #{boom_actor_critic_forward.1} parent=1 // pred_check_branch
      %22 = sbr.rel (0) target = $region13
    $region12: #{boom_actor_critic_forward.1} parent=1 // pred_region
      %s24 = ssub.s32 512, 512
      %25 = vsyncadd [#allocation3], %s24
      %s26 = sshll.u32 [#allocation2], 4
      %s27 = int_to_ptr.vmem [resolvable:$true] %s26
      %32 = dma.hbm_to_vmem [thread:$0]  %s2, 512, %s27, [#allocation3], 128, 128, 8
    $region13: #{boom_actor_critic_forward.1} parent=1 // pred_fallthru
      _
    // Predicated region
    $region14: #{boom_actor_critic_forward.1} parent=1 // pred_check
      _
    $region15: #{boom_actor_critic_forward.1} parent=1 // pred_check_branch
      %34 = sbr.rel (0) target = $region17
    $region16: #{boom_actor_critic_forward.1} parent=1 // pred_region
      _
    $region17: #{boom_actor_critic_forward.1} parent=1 // pred_fallthru
      _
    // Predicated region
    $region18: #{boom_actor_critic_forward.1} parent=1 // pred_check
      _
    $region19: #{boom_actor_critic_forward.1} parent=1 // pred_check_branch
      %36 = sbr.rel (0) target = $region21
    $region20: #{boom_actor_critic_forward.1} parent=1 // pred_region
      %s38 = ssub.s32 32, 32
      %39 = vsyncadd [#allocation5], %s38
      %s41 = sshll.u32 [#allocation4], 4
      %s42 = int_to_ptr.vmem [resolvable:$true] %s41
      %44 = dma.hbm_to_vmem [thread:$0]  %s4, 32, %s42, [#allocation5]
    $region21: #{boom_actor_critic_forward.1} parent=1 // pred_fallthru
      _
    // Predicated region
    $region22: #{boom_actor_critic_forward.1} parent=1 // pred_check
      _
    $region23: #{boom_actor_critic_forward.1} parent=1 // pred_check_branch
      %46 = sbr.rel (0) target = $region25
    $region24: #{boom_actor_critic_forward.1} parent=1 // pred_region
      %s48 = ssub.s32 4096, 4096
      %49 = vsyncadd [#allocation5], %s48
      %s50 = sshll.u32 [#allocation6], 4
      %s51 = int_to_ptr.vmem [resolvable:$true] %s50
      %56 = dma.hbm_to_vmem [thread:$0]  %s5, 4096, %s51, [#allocation5], 128, 128, 8
    $region25: #{boom_actor_critic_forward.1} parent=1 // pred_fallthru
      _
    // Predicated region
    $region26: #{boom_actor_critic_forward.1} parent=1 // pred_check
      _
    $region27: #{boom_actor_critic_forward.1} parent=1 // pred_check_branch
      %58 = sbr.rel (0) target = $region29
    $region28: #{boom_actor_critic_forward.1} parent=1 // pred_region
      %s60 = ssub.s32 32, 32
      %61 = vsyncadd [#allocation8], %s60
      %s63 = sshll.u32 [#allocation7], 4
      %s64 = int_to_ptr.vmem [resolvable:$true] %s63
      %66 = dma.hbm_to_vmem [thread:$0]  %s6, 32, %s64, [#allocation8]
    $region29: #{boom_actor_critic_forward.1} parent=1 // pred_fallthru
      _
    // Predicated region
    $region30: #{boom_actor_critic_forward.1} parent=1 // pred_check
      _
    $region31: #{boom_actor_critic_forward.1} parent=1 // pred_check_branch
      %68 = sbr.rel (0) target = $region33
    $region32: #{boom_actor_critic_forward.1} parent=1 // pred_region
      %s70 = ssub.s32 2048, 2048
      %71 = vsyncadd [#allocation8], %s70
      %s72 = sshll.u32 [#allocation9], 4
      %s73 = int_to_ptr.vmem [resolvable:$true] %s72
      %78 = dma.hbm_to_vmem [thread:$0]  %s7, 2048, %s73, [#allocation8], 64, 64, 4
    $region33: #{boom_actor_critic_forward.1} parent=1 // pred_fallthru
      _
    // Predicated region
    $region34: #{boom_actor_critic_forward.1} parent=1 // pred_check
      _
    $region35: #{boom_actor_critic_forward.1} parent=1 // pred_check_branch
      %80 = sbr.rel (0) target = $region37
    $region36: #{boom_actor_critic_forward.1} parent=1 // pred_region
      _
    $region37: #{boom_actor_critic_forward.1} parent=1 // pred_fallthru
      _
    // Predicated region
    $region38: #{boom_actor_critic_forward.1} parent=1 // pred_check
      _
    $region39: #{boom_actor_critic_forward.1} parent=1 // pred_check_branch
      %82 = sbr.rel (0) target = $region41
    $region40: #{boom_actor_critic_forward.1} parent=1 // pred_region
      %83 = dma.done [#allocation3], 512
    $region41: #{boom_actor_critic_forward.1} parent=1 // pred_fallthru
      _
    // Predicated region
    $region42: #{boom_actor_critic_forward.1} parent=1 // pred_check
      _
    $region43: #{boom_actor_critic_forward.1} parent=1 // pred_check_branch
      %85 = sbr.rel (0) target = $region45
    $region44: #{boom_actor_critic_forward.1} parent=1 // pred_region
      %86 = dma.done [#allocation5], 32
    $region45: #{boom_actor_critic_forward.1} parent=1 // pred_fallthru
      _
    // Predicated region
    $region46: #{boom_actor_critic_forward.1} parent=1 // pred_check
      _
    $region47: #{boom_actor_critic_forward.1} parent=1 // pred_check_branch
      %88 = sbr.rel (0) target = $region49
    $region48: #{boom_actor_critic_forward.1} parent=1 // pred_region
      %89 = dma.done [#allocation5], 4096
    $region49: #{boom_actor_critic_forward.1} parent=1 // pred_fallthru
      _
    // Predicated region
    $region50: #{boom_actor_critic_forward.1} parent=1 // pred_check
      _
    $region51: #{boom_actor_critic_forward.1} parent=1 // pred_check_branch
      %91 = sbr.rel (0) target = $region53
    $region52: #{boom_actor_critic_forward.1} parent=1 // pred_region
      %92 = dma.done [#allocation8], 32
    $region53: #{boom_actor_critic_forward.1} parent=1 // pred_fallthru
      _
    // Predicated region
    $region54: #{boom_actor_critic_forward.1} parent=1 // pred_check
      _
    $region55: #{boom_actor_critic_forward.1} parent=1 // pred_check_branch
      %94 = sbr.rel (0) target = $region57
    $region56: #{boom_actor_critic_forward.1} parent=1 // pred_region
      %95 = dma.done [#allocation8], 2048
    $region57: #{boom_actor_critic_forward.1} parent=1 // pred_fallthru
      _
    %v97 = vld [vmem:[%s0] sm:$0xff]
    %v98 = vpack.c.bf16 %v97, %v97
    %v99 = vld [vmem:[#allocation2] sm:$0xff]
    %v100 = vld [vmem:[#allocation2 + $0x8] sm:$0xff]
    %v101 = vld [vmem:[#allocation2 + $0x10] sm:$0xff]
    %v102 = vld [vmem:[#allocation2 + $0x18] sm:$0xff]
    %v103 = vld [vmem:[%s1] sm:$0xff]
    %v104 = vld [vmem:[%s3] ss:$4 sm:$0x3]
    %106 = vset.pattern.permute.xlu0 0
    %107 = vperm.xlu0 %106, %v103
    %v108 = vpop.permute.xlu0 %107
    %v111 = vlaneseq
    %v112 = vshrl.u32 %v111, 7
    %v113 = vsub.s32 0, %v112
    %v114 = vrot.slane %v104, %v113
    %v115 = vlaneseq
    %v116 = vshrl.u32 %v115, 7
    %v117 = vsub.s32 1, %v116
    %v118 = vrot.slane %v104, %v117
    %v121 = vmul.f32 %v108, %v114
    %v122 = vmul.f32 %v108, %v118
    %v127 = vunpack.c.l.b16 %v99
    %v128 = vunpack.c.h.b16 %v99
    %v129 = vunpack.c.l.b16 %v100
    %v130 = vunpack.c.h.b16 %v100
    %v131 = vunpack.c.l.b16 %v101
    %v132 = vunpack.c.h.b16 %v101
    %v133 = vunpack.c.l.b16 %v102
    %v134 = vunpack.c.h.b16 %v102
    %v135 = vpack.c.b16 %v129, %v127
    %v136 = vpack.c.b16 %v130, %v128
    %v137 = vpack.c.b16 %v133, %v131
    %v138 = vpack.c.b16 %v134, %v132
    %vm143 = vcmask 261120
    %v145 = vsel %vm143, %v98, 0
    %147 = vmatprep.subr.bf16.mxu0 0
    %148 = vmatpush1.bf16.msra.mxu0 0
    %149 = vmatprep.subr.bf16.mxu0 0
    %150 = vmatpush1.bf16.msra.mxu0 0
    %151 = vmatprep.subr.bf16.mxu0 0
    %152 = vmatpush1.bf16.msra.mxu0 0
    %153 = vmatprep.subr.bf16.mxu0 0
    %154 = vmatpush1.bf16.msra.mxu0 0
    %155 = vmatprep.subr.bf16.mxu0 0
    %156 = vmatpush1.bf16.msra.mxu0 0
    %157 = vmatprep.subr.bf16.mxu0 0
    %158 = vmatpush1.bf16.msra.mxu0 0
    %159 = vmatprep.subr.bf16.mxu0 %v138
    %160 = vmatpush1.bf16.msra.mxu0 %v137
    %161 = vmatprep.subr.bf16.mxu0 %v136
    %162 = vmatpush1.bf16.msra.mxu0 %v135
    %163 = vmatprep.subr.bf16.mxu0 0
    %164 = vmatpush2.bf16.msra.mxu0 0
    %165 = vmatprep.subr.bf16.mxu0 0
    %166 = vmatpush2.bf16.msra.mxu0 0
    %167 = vmatprep.subr.bf16.mxu0 0
    %168 = vmatpush2.bf16.msra.mxu0 0
    %169 = vmatprep.subr.bf16.mxu0 0
    %170 = vmatpush2.bf16.msra.mxu0 0
    %171 = vmatprep.subr.bf16.mxu0 0
    %172 = vmatpush2.bf16.msra.mxu0 0
    %173 = vmatprep.subr.bf16.mxu0 0
    %174 = vmatpush2.bf16.msra.mxu0 0
    %175 = vmatprep.subr.bf16.mxu0 0
    %176 = vmatpush2.bf16.msra.mxu0 0
    %177 = vmatprep.subr.bf16.mxu0 0
    %178 = vmatpush2.bf16.msra.mxu0 0
    %179 = vmatprep.mubr.bf16.mxu0 0
    %180 = vmatmul.mubr.bf16.gmra.mxu0 %v145
    %v181 = vpop.f32.mrf.mxu0
    %v182 = vadd.f32 %v121, %v181
    %v183 = vpop.f32.mrf.mxu0
    %v184 = vadd.f32 %v122, %v183
    %v185 = vpop.f32.mrf.mxu0
    %v186 = vpop.f32.mrf.mxu0
    %187 = vdwg.mxu0
    %s188 = scalar_lea.vmem %s3, 1
    %v189 = vld [vmem:[%s188] ss:$4 sm:$0x3]
    %190 = vset.pattern.permute.xlu0 1
    %191 = vperm.xlu0 %190, %v103
    %v192 = vpop.permute.xlu0 %191
    %v195 = vlaneseq
    %v196 = vshrl.u32 %v195, 7
    %v197 = vsub.s32 0, %v196
    %v198 = vrot.slane %v189, %v197
    %v199 = vlaneseq
    %v200 = vshrl.u32 %v199, 7
    %v201 = vsub.s32 1, %v200
    %v202 = vrot.slane %v189, %v201
    %v205 = vmul.f32 %v192, %v198
    %v206 = vmul.f32 %v192, %v202
    %v207 = vadd.f32 %v182, %v205
    %v208 = vadd.f32 %v184, %v206
    %s209 = scalar_lea.vmem %s3, 2
    %v210 = vld [vmem:[%s209] ss:$4 sm:$0x3]
    %211 = vset.pattern.permute.xlu0 2
    %212 = vperm.xlu0 %211, %v103
    %v213 = vpop.permute.xlu0 %212
    %v216 = vlaneseq
    %v217 = vshrl.u32 %v216, 7
    %v218 = vsub.s32 0, %v217
    %v219 = vrot.slane %v210, %v218
    %v220 = vlaneseq
    %v221 = vshrl.u32 %v220, 7
    %v222 = vsub.s32 1, %v221
    %v223 = vrot.slane %v210, %v222
    %v226 = vmul.f32 %v213, %v219
    %v227 = vmul.f32 %v213, %v223
    %v228 = vadd.f32 %v207, %v226
    %v229 = vadd.f32 %v208, %v227
    %s230 = scalar_lea.vmem %s3, 3
    %v231 = vld [vmem:[%s230] ss:$4 sm:$0x3]
    %232 = vset.pattern.permute.xlu0 3
    %233 = vperm.xlu0 %232, %v103
    %v234 = vpop.permute.xlu0 %233
    %v237 = vlaneseq
    %v238 = vshrl.u32 %v237, 7
    %v239 = vsub.s32 0, %v238
    %v240 = vrot.slane %v231, %v239
    %v241 = vlaneseq
    %v242 = vshrl.u32 %v241, 7
    %v243 = vsub.s32 1, %v242
    %v244 = vrot.slane %v231, %v243
    %v247 = vmul.f32 %v234, %v240
    %v248 = vmul.f32 %v234, %v244
    %v249 = vadd.f32 %v228, %v247
    %v250 = vadd.f32 %v229, %v248
    %v251 = vld [vmem:[#allocation4] sm:$0x3]
    %v253 = vlaneseq
    %v254 = vshrl.u32 %v253, 7
    %v255 = vsub.s32 0, %v254
    %v256 = vrot.slane %v251, %v255
    %v257 = vlaneseq
    %v258 = vshrl.u32 %v257, 7
    %v259 = vsub.s32 1, %v258
    %v260 = vrot.slane %v251, %v259
    %v263 = vadd.f32 %v249, %v256
    %v264 = vadd.f32 %v250, %v260
    %v265 = vmul.f32 %v263, 0.01
    %v266 = vmul.f32 %v264, 0.01
    %v267 = vmax.f32 %v263, %v265
    %v268 = vmax.f32 %v264, %v266
    %v269 = vpack.c.bf16 %v267, %v267
    %v270 = vpack.c.bf16 %v268, %v268
    %v271 = vld [vmem:[#allocation7] sm:$0x3]
    %v272 = vld [vmem:[#allocation6] sm:$0xff]
    %v273 = vld [vmem:[#allocation6 + $0x8] sm:$0xff]
    %v274 = vld [vmem:[#allocation6 + $0x10] sm:$0xff]
    %v275 = vld [vmem:[#allocation6 + $0x18] sm:$0xff]
    %v276 = vld [vmem:[#allocation6 + $0x20] sm:$0xff]
    %v277 = vld [vmem:[#allocation6 + $0x28] sm:$0xff]
    %v278 = vld [vmem:[#allocation6 + $0x30] sm:$0xff]
    %v279 = vld [vmem:[#allocation6 + $0x38] sm:$0xff]
    %v280 = vld [vmem:[#allocation6 + $0x40] sm:$0xff]
    %v281 = vld [vmem:[#allocation6 + $0x48] sm:$0xff]
    %v282 = vld [vmem:[#allocation6 + $0x50] sm:$0xff]
    %v283 = vld [vmem:[#allocation6 + $0x58] sm:$0xff]
    %v284 = vld [vmem:[#allocation6 + $0x60] sm:$0xff]
    %v285 = vld [vmem:[#allocation6 + $0x68] sm:$0xff]
    %v286 = vld [vmem:[#allocation6 + $0x70] sm:$0xff]
    %v287 = vld [vmem:[#allocation6 + $0x78] sm:$0xff]
    %v288 = vld [vmem:[#allocation6 + $0x80] sm:$0xff]
    %v289 = vld [vmem:[#allocation6 + $0x88] sm:$0xff]
    %v290 = vld [vmem:[#allocation6 + $0x90] sm:$0xff]
    %v291 = vld [vmem:[#allocation6 + $0x98] sm:$0xff]
    %v292 = vld [vmem:[#allocation6 + $0xa0] sm:$0xff]
    %v293 = vld [vmem:[#allocation6 + $0xa8] sm:$0xff]
    %v294 = vld [vmem:[#allocation6 + $0xb0] sm:$0xff]
    %v295 = vld [vmem:[#allocation6 + $0xb8] sm:$0xff]
    %v296 = vld [vmem:[#allocation6 + $0xc0] sm:$0xff]
    %v297 = vld [vmem:[#allocation6 + $0xc8] sm:$0xff]
    %v298 = vld [vmem:[#allocation6 + $0xd0] sm:$0xff]
    %v299 = vld [vmem:[#allocation6 + $0xd8] sm:$0xff]
    %v300 = vld [vmem:[#allocation6 + $0xe0] sm:$0xff]
    %v301 = vld [vmem:[#allocation6 + $0xe8] sm:$0xff]
    %v302 = vld [vmem:[#allocation6 + $0xf0] sm:$0xff]
    %v303 = vld [vmem:[#allocation6 + $0xf8] sm:$0xff]
    %v305 = vlaneseq
    %v306 = vshrl.u32 %v305, 7
    %v307 = vsub.s32 0, %v306
    %v308 = vrot.slane %v271, %v307
    %v309 = vlaneseq
    %v310 = vshrl.u32 %v309, 7
    %v311 = vsub.s32 1, %v310
    %v312 = vrot.slane %v271, %v311
    %v347 = vunpack.c.l.b16 %v272
    %v348 = vunpack.c.h.b16 %v272
    %v349 = vunpack.c.l.b16 %v273
    %v350 = vunpack.c.h.b16 %v273
    %v351 = vunpack.c.l.b16 %v274
    %v352 = vunpack.c.h.b16 %v274
    %v353 = vunpack.c.l.b16 %v275
    %v354 = vunpack.c.h.b16 %v275
    %v355 = vunpack.c.l.b16 %v276
    %v356 = vunpack.c.h.b16 %v276
    %v357 = vunpack.c.l.b16 %v277
    %v358 = vunpack.c.h.b16 %v277
    %v359 = vunpack.c.l.b16 %v278
    %v360 = vunpack.c.h.b16 %v278
    %v361 = vunpack.c.l.b16 %v279
    %v362 = vunpack.c.h.b16 %v279
    %v363 = vunpack.c.l.b16 %v280
    %v364 = vunpack.c.h.b16 %v280
    %v365 = vunpack.c.l.b16 %v281
    %v366 = vunpack.c.h.b16 %v281
    %v367 = vunpack.c.l.b16 %v282
    %v368 = vunpack.c.h.b16 %v282
    %v369 = vunpack.c.l.b16 %v283
    %v370 = vunpack.c.h.b16 %v283
    %v371 = vunpack.c.l.b16 %v284
    %v372 = vunpack.c.h.b16 %v284
    %v373 = vunpack.c.l.b16 %v285
    %v374 = vunpack.c.h.b16 %v285
    %v375 = vunpack.c.l.b16 %v286
    %v376 = vunpack.c.h.b16 %v286
    %v377 = vunpack.c.l.b16 %v287
    %v378 = vunpack.c.h.b16 %v287
    %v379 = vunpack.c.l.b16 %v288
    %v380 = vunpack.c.h.b16 %v288
    %v381 = vunpack.c.l.b16 %v289
    %v382 = vunpack.c.h.b16 %v289
    %v383 = vunpack.c.l.b16 %v290
    %v384 = vunpack.c.h.b16 %v290
    %v385 = vunpack.c.l.b16 %v291
    %v386 = vunpack.c.h.b16 %v291
    %v387 = vunpack.c.l.b16 %v292
    %v388 = vunpack.c.h.b16 %v292
    %v389 = vunpack.c.l.b16 %v293
    %v390 = vunpack.c.h.b16 %v293
    %v391 = vunpack.c.l.b16 %v294
    %v392 = vunpack.c.h.b16 %v294
    %v393 = vunpack.c.l.b16 %v295
    %v394 = vunpack.c.h.b16 %v295
    %v395 = vunpack.c.l.b16 %v296
    %v396 = vunpack.c.h.b16 %v296
    %v397 = vunpack.c.l.b16 %v297
    %v398 = vunpack.c.h.b16 %v297
    %v399 = vunpack.c.l.b16 %v298
    %v400 = vunpack.c.h.b16 %v298
    %v401 = vunpack.c.l.b16 %v299
    %v402 = vunpack.c.h.b16 %v299
    %v403 = vunpack.c.l.b16 %v300
    %v404 = vunpack.c.h.b16 %v300
    %v405 = vunpack.c.l.b16 %v301
    %v406 = vunpack.c.h.b16 %v301
    %v407 = vunpack.c.l.b16 %v302
    %v408 = vunpack.c.h.b16 %v302
    %v409 = vunpack.c.l.b16 %v303
    %v410 = vunpack.c.h.b16 %v303
    %v411 = vpack.c.b16 %v349, %v347
    %v412 = vpack.c.b16 %v350, %v348
    %v413 = vpack.c.b16 %v353, %v351
    %v414 = vpack.c.b16 %v354, %v352
    %v415 = vpack.c.b16 %v357, %v355
    %v416 = vpack.c.b16 %v358, %v356
    %v417 = vpack.c.b16 %v361, %v359
    %v418 = vpack.c.b16 %v362, %v360
    %v419 = vpack.c.b16 %v365, %v363
    %v420 = vpack.c.b16 %v366, %v364
    %v421 = vpack.c.b16 %v369, %v367
    %v422 = vpack.c.b16 %v370, %v368
    %v423 = vpack.c.b16 %v373, %v371
    %v424 = vpack.c.b16 %v374, %v372
    %v425 = vpack.c.b16 %v377, %v375
    %v426 = vpack.c.b16 %v378, %v376
    %v427 = vpack.c.b16 %v381, %v379
    %v428 = vpack.c.b16 %v382, %v380
    %v429 = vpack.c.b16 %v385, %v383
    %v430 = vpack.c.b16 %v386, %v384
    %v431 = vpack.c.b16 %v389, %v387
    %v432 = vpack.c.b16 %v390, %v388
    %v433 = vpack.c.b16 %v393, %v391
    %v434 = vpack.c.b16 %v394, %v392
    %v435 = vpack.c.b16 %v397, %v395
    %v436 = vpack.c.b16 %v398, %v396
    %v437 = vpack.c.b16 %v401, %v399
    %v438 = vpack.c.b16 %v402, %v400
    %v439 = vpack.c.b16 %v405, %v403
    %v440 = vpack.c.b16 %v406, %v404
    %v441 = vpack.c.b16 %v409, %v407
    %v442 = vpack.c.b16 %v410, %v408
    %475 = vmatprep.subr.bf16.mxu0 %v426
    %476 = vmatpush1.bf16.msra.mxu0 %v425
    %477 = vmatprep.subr.bf16.mxu0 %v424
    %478 = vmatpush1.bf16.msra.mxu0 %v423
    %479 = vmatprep.subr.bf16.mxu0 %v422
    %480 = vmatpush1.bf16.msra.mxu0 %v421
    %481 = vmatprep.subr.bf16.mxu0 %v420
    %482 = vmatpush1.bf16.msra.mxu0 %v419
    %483 = vmatprep.subr.bf16.mxu0 %v418
    %484 = vmatpush1.bf16.msra.mxu0 %v417
    %485 = vmatprep.subr.bf16.mxu0 %v416
    %486 = vmatpush1.bf16.msra.mxu0 %v415
    %487 = vmatprep.subr.bf16.mxu0 %v414
    %488 = vmatpush1.bf16.msra.mxu0 %v413
    %489 = vmatprep.subr.bf16.mxu0 %v412
    %490 = vmatpush1.bf16.msra.mxu0 %v411
    %491 = vmatprep.subr.bf16.mxu0 %v442
    %492 = vmatpush2.bf16.msra.mxu0 %v441
    %493 = vmatprep.subr.bf16.mxu0 %v440
    %494 = vmatpush2.bf16.msra.mxu0 %v439
    %495 = vmatprep.subr.bf16.mxu0 %v438
    %496 = vmatpush2.bf16.msra.mxu0 %v437
    %497 = vmatprep.subr.bf16.mxu0 %v436
    %498 = vmatpush2.bf16.msra.mxu0 %v435
    %499 = vmatprep.subr.bf16.mxu0 %v434
    %500 = vmatpush2.bf16.msra.mxu0 %v433
    %501 = vmatprep.subr.bf16.mxu0 %v432
    %502 = vmatpush2.bf16.msra.mxu0 %v431
    %503 = vmatprep.subr.bf16.mxu0 %v430
    %504 = vmatpush2.bf16.msra.mxu0 %v429
    %505 = vmatprep.subr.bf16.mxu0 %v428
    %506 = vmatpush2.bf16.msra.mxu0 %v427
    %507 = vmatprep.mubr.bf16.mxu0 %v270
    %508 = vmatmul.mubr.bf16.gmra.mxu0 %v269
    %v509 = vpop.f32.mrf.mxu0
    %v510 = vadd.f32 %v308, %v509
    %v511 = vpop.f32.mrf.mxu0
    %v512 = vadd.f32 %v312, %v511
    %v513 = vpop.f32.mrf.mxu0
    %v514 = vpop.f32.mrf.mxu0
    %515 = vdwg.mxu0
    %v516 = vmul.f32 %v510, 0.01
    %v517 = vmul.f32 %v512, 0.01
    %v518 = vmax.f32 %v510, %v516
    %v519 = vmax.f32 %v512, %v517
    %v520 = vpack.c.bf16 %v518, %v518
    %v521 = vpack.c.bf16 %v519, %v519
    %v522 = vld [vmem:[#allocation9] sm:$0xf]
    %v523 = vld [vmem:[#allocation9 + $0x4] sm:$0xf]
    %v524 = vld [vmem:[#allocation9 + $0x8] sm:$0xf]
    %v525 = vld [vmem:[#allocation9 + $0xc] sm:$0xf]
    %v526 = vld [vmem:[#allocation9 + $0x10] sm:$0xf]
    %v527 = vld [vmem:[#allocation9 + $0x14] sm:$0xf]
    %v528 = vld [vmem:[#allocation9 + $0x18] sm:$0xf]
    %v529 = vld [vmem:[#allocation9 + $0x1c] sm:$0xf]
    %v530 = vld [vmem:[#allocation9 + $0x20] sm:$0xf]
    %v531 = vld [vmem:[#allocation9 + $0x24] sm:$0xf]
    %v532 = vld [vmem:[#allocation9 + $0x28] sm:$0xf]
    %v533 = vld [vmem:[#allocation9 + $0x2c] sm:$0xf]
    %v534 = vld [vmem:[#allocation9 + $0x30] sm:$0xf]
    %v535 = vld [vmem:[#allocation9 + $0x34] sm:$0xf]
    %v536 = vld [vmem:[#allocation9 + $0x38] sm:$0xf]
    %v537 = vld [vmem:[#allocation9 + $0x3c] sm:$0xf]
    %v538 = vld [vmem:[#allocation9 + $0x40] sm:$0xf]
    %v539 = vld [vmem:[#allocation9 + $0x44] sm:$0xf]
    %v540 = vld [vmem:[#allocation9 + $0x48] sm:$0xf]
    %v541 = vld [vmem:[#allocation9 + $0x4c] sm:$0xf]
    %v542 = vld [vmem:[#allocation9 + $0x50] sm:$0xf]
    %v543 = vld [vmem:[#allocation9 + $0x54] sm:$0xf]
    %v544 = vld [vmem:[#allocation9 + $0x58] sm:$0xf]
    %v545 = vld [vmem:[#allocation9 + $0x5c] sm:$0xf]
    %v546 = vld [vmem:[#allocation9 + $0x60] sm:$0xf]
    %v547 = vld [vmem:[#allocation9 + $0x64] sm:$0xf]
    %v548 = vld [vmem:[#allocation9 + $0x68] sm:$0xf]
    %v549 = vld [vmem:[#allocation9 + $0x6c] sm:$0xf]
    %v550 = vld [vmem:[#allocation9 + $0x70] sm:$0xf]
    %v551 = vld [vmem:[#allocation9 + $0x74] sm:$0xf]
    %v552 = vld [vmem:[#allocation9 + $0x78] sm:$0xf]
    %v553 = vld [vmem:[#allocation9 + $0x7c] sm:$0xf]
    %v554 = vld [vmem:[%s8] sm:$0x1]
    %v556 = vlaneseq
    %v557 = vshrl.u32 %v556, 7
    %v558 = vsub.s32 0, %v557
    %v559 = vrot.slane %v554, %v558
    %v593 = vunpack.c.l.b16 %v522
    %v594 = vunpack.c.l.b16 %v523
    %v595 = vunpack.c.l.b16 %v524
    %v596 = vunpack.c.l.b16 %v525
    %v597 = vunpack.c.l.b16 %v526
    %v598 = vunpack.c.l.b16 %v527
    %v599 = vunpack.c.l.b16 %v528
    %v600 = vunpack.c.l.b16 %v529
    %v601 = vunpack.c.l.b16 %v530
    %v602 = vunpack.c.l.b16 %v531
    %v603 = vunpack.c.l.b16 %v532
    %v604 = vunpack.c.l.b16 %v533
    %v605 = vunpack.c.l.b16 %v534
    %v606 = vunpack.c.l.b16 %v535
    %v607 = vunpack.c.l.b16 %v536
    %v608 = vunpack.c.l.b16 %v537
    %v609 = vunpack.c.l.b16 %v538
    %v610 = vunpack.c.l.b16 %v539
    %v611 = vunpack.c.l.b16 %v540
    %v612 = vunpack.c.l.b16 %v541
    %v613 = vunpack.c.l.b16 %v542
    %v614 = vunpack.c.l.b16 %v543
    %v615 = vunpack.c.l.b16 %v544
    %v616 = vunpack.c.l.b16 %v545
    %v617 = vunpack.c.l.b16 %v546
    %v618 = vunpack.c.l.b16 %v547
    %v619 = vunpack.c.l.b16 %v548
    %v620 = vunpack.c.l.b16 %v549
    %v621 = vunpack.c.l.b16 %v550
    %v622 = vunpack.c.l.b16 %v551
    %v623 = vunpack.c.l.b16 %v552
    %v624 = vunpack.c.l.b16 %v553
    %v625 = vpack.c.b16 %v594, %v593
    %v626 = vpack.c.b16 %v596, %v595
    %v627 = vpack.c.b16 %v598, %v597
    %v628 = vpack.c.b16 %v600, %v599
    %v629 = vpack.c.b16 %v602, %v601
    %v630 = vpack.c.b16 %v604, %v603
    %v631 = vpack.c.b16 %v606, %v605
    %v632 = vpack.c.b16 %v608, %v607
    %v633 = vpack.c.b16 %v610, %v609
    %v634 = vpack.c.b16 %v612, %v611
    %v635 = vpack.c.b16 %v614, %v613
    %v636 = vpack.c.b16 %v616, %v615
    %v637 = vpack.c.b16 %v618, %v617
    %v638 = vpack.c.b16 %v620, %v619
    %v639 = vpack.c.b16 %v622, %v621
    %v640 = vpack.c.b16 %v624, %v623
    %657 = vmatprep.subr.bf16.mxu0 0
    %658 = vmatpush1.bf16.msra.mxu0 %v632
    %659 = vmatprep.subr.bf16.mxu0 0
    %660 = vmatpush1.bf16.msra.mxu0 %v631
    %661 = vmatprep.subr.bf16.mxu0 0
    %662 = vmatpush1.bf16.msra.mxu0 %v630
    %663 = vmatprep.subr.bf16.mxu0 0
    %664 = vmatpush1.bf16.msra.mxu0 %v629
    %665 = vmatprep.subr.bf16.mxu0 0
    %666 = vmatpush1.bf16.msra.mxu0 %v628
    %667 = vmatprep.subr.bf16.mxu0 0
    %668 = vmatpush1.bf16.msra.mxu0 %v627
    %669 = vmatprep.subr.bf16.mxu0 0
    %670 = vmatpush1.bf16.msra.mxu0 %v626
    %671 = vmatprep.subr.bf16.mxu0 0
    %672 = vmatpush1.bf16.msra.mxu0 %v625
    %673 = vmatprep.subr.bf16.mxu0 0
    %674 = vmatpush2.bf16.msra.mxu0 %v640
    %675 = vmatprep.subr.bf16.mxu0 0
    %676 = vmatpush2.bf16.msra.mxu0 %v639
    %677 = vmatprep.subr.bf16.mxu0 0
    %678 = vmatpush2.bf16.msra.mxu0 %v638
    %679 = vmatprep.subr.bf16.mxu0 0
    %680 = vmatpush2.bf16.msra.mxu0 %v637
    %681 = vmatprep.subr.bf16.mxu0 0
    %682 = vmatpush2.bf16.msra.mxu0 %v636
    %683 = vmatprep.subr.bf16.mxu0 0
    %684 = vmatpush2.bf16.msra.mxu0 %v635
    %685 = vmatprep.subr.bf16.mxu0 0
    %686 = vmatpush2.bf16.msra.mxu0 %v634
    %687 = vmatprep.subr.bf16.mxu0 0
    %688 = vmatpush2.bf16.msra.mxu0 %v633
    %689 = vmatprep.mubr.bf16.mxu0 %v521
    %690 = vmatmul.mubr.bf16.gmra.mxu0 %v520
    %v691 = vpop.f32.mrf.mxu0
    %v692 = vadd.f32 %v559, %v691
    %v693 = vpop.f32.mrf.mxu0
    %v694 = vpop.f32.mrf.mxu0
    %v695 = vpop.f32.mrf.mxu0
    %696 = vdwg.mxu0
    %v697 = vpack.c.bf16 %v692, %v692
    %698 = vst [vmem:[%s9] sm:$0xf] %v697
    // Predicated region
    $region58: #{boom_actor_critic_forward.1} parent=1 // pred_check
      _
    $region59: #{boom_actor_critic_forward.1} parent=1 // pred_check_branch
      %700 = sbr.rel (0) target = $region61
    $region60: #{boom_actor_critic_forward.1} parent=1 // pred_region
      _
    $region61: #{boom_actor_critic_forward.1} parent=1 // pred_fallthru
      _
    // Predicated region
    $region62: #{boom_actor_critic_forward.1} parent=1 // pred_check
      _
    $region63: #{boom_actor_critic_forward.1} parent=1 // pred_check_branch
      %702 = sbr.rel (0) target = $region65
    $region64: #{boom_actor_critic_forward.1} parent=1 // pred_region
      _
    $region65: #{boom_actor_critic_forward.1} parent=1 // pred_fallthru
      _
    %703 = vsyncpa [#allocation3], 1
    %704 = vsyncpa [#allocation5], 1
    %705 = vsyncpa [#allocation8], 1

</llo_original>
